<compile_context>
chip_gen: v6e
topology: v6e:2x2x1
jax: 0.10.0
libtpu: 0.0.40
codegen_flags: <defaults>
</compile_context>

<pallas_src>
import functools

import jax
import jax.numpy as jnp
from jax.experimental import pallas as pl
from jax.experimental.pallas import tpu as pltpu


def _round_up(n, m):
    return ((n + m - 1) // m) * m


def encoder_kernel(x_ref, w_ref, b_ref, gamma_ref, beta_ref, o_ref,
                   *, n_layers, eps, f_true):
    """One row-tile of the encoder.

    x_ref:     (TM, Fp)            bf16 tile of flattened (zero-padded) rows
    w_ref:     (n_layers, Fp, Fp)  bf16 per-layer weight (resident in VMEM)
    b_ref:     (n_layers, 1, Fp)   f32 per-layer bias (padded lanes zero)
    gamma_ref: (1, Fp)             f32 LayerNorm weight (padded lanes zero)
    beta_ref:  (1, Fp)             f32 LayerNorm bias   (padded lanes zero)
    o_ref:     (TM, Fp)            f32 output tile
    """
    x = x_ref[...].astype(jnp.float32)            # (TM, Fp), f32 working copy

    # TODO(synk): EncoderLayer definition is not provided in the source module
    # (real ASTGNN layer has spatial/temporal attention + GCN sublayers);
    # stand-in is a deterministic position-wise sublayer x = x + relu(x@W + b).
    for l in range(n_layers):                     # small N -> static unroll
        w = w_ref[l]                              # (Fp, Fp) bf16
        b = b_ref[l].astype(jnp.float32)          # (1, Fp)
        h = jnp.dot(x.astype(jnp.bfloat16), w,
                    preferred_element_type=jnp.float32) + b
        x = x + jnp.maximum(h, 0.0)               # padded lanes stay exactly 0

    # Final nn.LayerNorm(layer.size): biased variance over the TRUE feature
    # width f_true.  Padded lanes of x are zero, so plain sums over the padded
    # axis equal sums over the true lanes; use moments E[x^2]-E[x]^2 so no
    # lane mask is needed.
    inv_f = 1.0 / float(f_true)
    s1 = jnp.sum(x, axis=-1, keepdims=True)
    s2 = jnp.sum(x * x, axis=-1, keepdims=True)
    mean = s1 * inv_f
    var = jnp.maximum(s2 * inv_f - mean * mean, 0.0)
    inv = jax.lax.rsqrt(var + eps)
    y = (x - mean) * inv * gamma_ref[...].astype(jnp.float32) \
        + beta_ref[...].astype(jnp.float32)

    o_ref[...] = y.astype(o_ref.dtype)


def encoder_forward(x, weights, biases, gamma, beta, *, eps=1e-5, tm=512):
    """x: (B, N, T, F) float32.  weights: (L, F, F), biases: (L, F),
    gamma/beta: (F,).  Returns (B, N, T, F) float32."""
    B, Nn, T, F = x.shape
    n_layers = weights.shape[0]
    M = B * Nn * T

    # Lane-dense feature padding and row-tile selection.
    Fp = _round_up(F, 128)
    tm_eff = _round_up(min(tm, _round_up(M, 8)), 8)
    # Keep at least 2 grid steps when possible (v7x has 2 TensorCores).
    while tm_eff >= 16 and pl.cdiv(M, tm_eff) < 2:
        tm_eff //= 2
    tm_eff = max(8, _round_up(tm_eff, 8))
    M_pad = _round_up(M, tm_eff)
    grid = (M_pad // tm_eff,)

    # Wrapper-side padding / casts (padded rows & lanes are zero -> inert).
    x2d = jnp.pad(x.reshape(M, F),
                  ((0, M_pad - M), (0, Fp - F))).astype(jnp.bfloat16)
    w3d = jnp.pad(weights,
                  ((0, 0), (0, Fp - F), (0, Fp - F))).astype(jnp.bfloat16)
    b3d = jnp.pad(biases.reshape(n_layers, 1, F),
                  ((0, 0), (0, 0), (0, Fp - F))).astype(jnp.float32)
    g2d = jnp.pad(gamma.reshape(1, F), ((0, 0), (0, Fp - F))).astype(jnp.float32)
    be2d = jnp.pad(beta.reshape(1, F), ((0, 0), (0, Fp - F))).astype(jnp.float32)

    kernel = functools.partial(encoder_kernel, n_layers=n_layers, eps=eps,
                               f_true=F)

    out2d = pl.pallas_call(
        kernel,
        out_shape=jax.ShapeDtypeStruct((M_pad, Fp), jnp.float32),
        grid_spec=pltpu.PrefetchScalarGridSpec(
            num_scalar_prefetch=0,
            grid=grid,
            in_specs=[
                pl.BlockSpec((tm_eff, Fp), lambda i: (i, 0)),              # x rows (bf16)
                pl.BlockSpec((n_layers, Fp, Fp), lambda i: (0, 0, 0)),     # W resident
                pl.BlockSpec((n_layers, 1, Fp), lambda i: (0, 0, 0)),      # b resident
                pl.BlockSpec((1, Fp), lambda i: (0, 0)),                   # ln gamma
                pl.BlockSpec((1, Fp), lambda i: (0, 0)),                   # ln beta
            ],
            out_specs=pl.BlockSpec((tm_eff, Fp), lambda i: (i, 0)),
        ),
        compiler_params=pltpu.CompilerParams(
            dimension_semantics=("parallel",),
            vmem_limit_bytes=32 * 1024 * 1024),
    )(x2d, w3d, b3d, g2d, be2d)

    return out2d[:M, :F].reshape(B, Nn, T, F).astype(x.dtype)


def encoder_reference(x, weights, biases, gamma, beta, eps=1e-5):
    """Pure-JAX reference with matching bf16 matmul-operand rounding."""
    B, Nn, T, F = x.shape
    h = x.reshape(-1, F).astype(jnp.bfloat16).astype(jnp.float32)
    for l in range(weights.shape[0]):
        z = jnp.dot(h.astype(jnp.bfloat16),
                    weights[l].astype(jnp.bfloat16),
                    preferred_element_type=jnp.float32) + biases[l]
        h = h + jnp.maximum(z, 0.0)
    mean = jnp.mean(h, axis=-1, keepdims=True)
    var = jnp.mean((h - mean) ** 2, axis=-1, keepdims=True)
    y = (h - mean) * jax.lax.rsqrt(var + eps) * gamma + beta
    return y.reshape(B, Nn, T, F)


if __name__ == "__main__":
    # Small shapes consistent with the module: (batch, N_nodes, T_in, F_in)
    B, Nn, T, F = 2, 16, 8, 32
    n_layers = 2

    key = jax.random.PRNGKey(0)
    kx, kw, kb = jax.random.split(key, 3)

    x = jax.random.normal(kx, (B, Nn, T, F), dtype=jnp.float32)

    # Deterministic parameter init (synthetic; no checkpoint loading).
    weights = 0.05 * jax.random.normal(kw, (n_layers, F, F), dtype=jnp.float32)
    biases = 0.01 * jax.random.normal(kb, (n_layers, F), dtype=jnp.float32)
    gamma = jnp.ones((F,), dtype=jnp.float32)    # nn.LayerNorm default weight
    beta = jnp.zeros((F,), dtype=jnp.float32)    # nn.LayerNorm default bias

    out = encoder_forward(x, weights, biases, gamma, beta)
    jax.block_until_ready(out)

    assert out.shape == (B, Nn, T, F)
    assert jnp.isfinite(out).all()

    ref = encoder_reference(x, weights, biases, gamma, beta)
    assert jnp.allclose(out, ref, atol=5e-2, rtol=5e-2), (
        float(jnp.max(jnp.abs(out - ref))))

    print("KERNEL_OK")
</pallas_src>

<mosaic_0001>
module attributes {stable_mosaic.version = 11 : i64} {
  func.func @encoder_kernel(%arg0: i32, %arg1: memref<128x128xbf16, #tpu.memory_space<vmem>>, %arg2: memref<2x128x128xbf16, #tpu.memory_space<vmem>>, %arg3: memref<2x1x128xf32, #tpu.memory_space<vmem>>, %arg4: memref<1x128xf32, #tpu.memory_space<vmem>>, %arg5: memref<1x128xf32, #tpu.memory_space<vmem>>, %arg6: memref<128x128xf32, #tpu.memory_space<vmem>>) attributes {dimension_semantics = [#tpu.dimension_semantics<parallel>], iteration_bounds = array<i64: 2>, scalar_prefetch = 0 : i64, scratch_operands = 0 : i64, tpu.core_type = #tpu.core_type<tc>, window_params = [{transform_indices = @transform_0, window_bounds = array<i64: 128, 128>}, {pipeline_mode = #tpu.pipeline_mode<synchronous>, transform_indices = @transform_1, window_bounds = array<i64: 2, 128, 128>}, {pipeline_mode = #tpu.pipeline_mode<synchronous>, transform_indices = @transform_2, window_bounds = array<i64: 2, 1, 128>}, {pipeline_mode = #tpu.pipeline_mode<synchronous>, transform_indices = @transform_3, window_bounds = array<i64: 1, 128>}, {pipeline_mode = #tpu.pipeline_mode<synchronous>, transform_indices = @transform_4, window_bounds = array<i64: 1, 128>}, {transform_indices = @transform_5, window_bounds = array<i64: 128, 128>}]} {
    %c0 = arith.constant 0 : index
    %c0_0 = arith.constant 0 : index
    %0 = vector.load %arg1[%c0, %c0_0] : memref<128x128xbf16, #tpu.memory_space<vmem>>, vector<128x128xbf16>
    %1 = arith.extf %0 : vector<128x128xbf16> to vector<128x128xf32>
    %c0_1 = arith.constant 0 : index
    %c0_2 = arith.constant 0 : index
    %c0_3 = arith.constant 0 : index
    %2 = vector.load %arg2[%c0_1, %c0_2, %c0_3] : memref<2x128x128xbf16, #tpu.memory_space<vmem>>, vector<1x128x128xbf16>
    %3 = vector.shape_cast %2 : vector<1x128x128xbf16> to vector<128x128xbf16>
    %c0_4 = arith.constant 0 : index
    %c0_5 = arith.constant 0 : index
    %c0_6 = arith.constant 0 : index
    %4 = vector.load %arg3[%c0_4, %c0_5, %c0_6] : memref<2x1x128xf32, #tpu.memory_space<vmem>>, vector<1x1x128xf32>
    %5 = vector.shape_cast %4 : vector<1x1x128xf32> to vector<1x128xf32>
    %6 = arith.truncf %1 : vector<128x128xf32> to vector<128x128xbf16>
    %cst = arith.constant dense<0.000000e+00> : vector<128x128xf32>
    %7 = tpu.matmul %6, %3, %cst {dimension_numbers = #tpu.dot_dimension_numbers<[1], [0], [0], [1], [0, 0, 1, 1], [], []>} : vector<128x128xbf16>, vector<128x128xbf16>, vector<128x128xf32> -> vector<128x128xf32>
    %8 = vector.broadcast %5 : vector<1x128xf32> to vector<128x128xf32>
    %9 = arith.addf %7, %8 : vector<128x128xf32>
    %cst_7 = arith.constant 0.000000e+00 : f32
    %10 = vector.broadcast %cst_7 : f32 to vector<128x128xf32>
    %11 = arith.maximumf %9, %10 : vector<128x128xf32>
    %12 = arith.addf %1, %11 : vector<128x128xf32>
    %c1 = arith.constant 1 : index
    %c0_8 = arith.constant 0 : index
    %c0_9 = arith.constant 0 : index
    %13 = vector.load %arg2[%c1, %c0_8, %c0_9] : memref<2x128x128xbf16, #tpu.memory_space<vmem>>, vector<1x128x128xbf16>
    %14 = vector.shape_cast %13 : vector<1x128x128xbf16> to vector<128x128xbf16>
    %c1_10 = arith.constant 1 : index
    %c0_11 = arith.constant 0 : index
    %c0_12 = arith.constant 0 : index
    %15 = vector.load %arg3[%c1_10, %c0_11, %c0_12] : memref<2x1x128xf32, #tpu.memory_space<vmem>>, vector<1x1x128xf32>
    %16 = vector.shape_cast %15 : vector<1x1x128xf32> to vector<1x128xf32>
    %17 = arith.truncf %12 : vector<128x128xf32> to vector<128x128xbf16>
    %cst_13 = arith.constant dense<0.000000e+00> : vector<128x128xf32>
    %18 = tpu.matmul %17, %14, %cst_13 {dimension_numbers = #tpu.dot_dimension_numbers<[1], [0], [0], [1], [0, 0, 1, 1], [], []>} : vector<128x128xbf16>, vector<128x128xbf16>, vector<128x128xf32> -> vector<128x128xf32>
    %19 = vector.broadcast %16 : vector<1x128xf32> to vector<128x128xf32>
    %20 = arith.addf %18, %19 : vector<128x128xf32>
    %cst_14 = arith.constant 0.000000e+00 : f32
    %21 = vector.broadcast %cst_14 : f32 to vector<128x128xf32>
    %22 = arith.maximumf %20, %21 : vector<128x128xf32>
    %23 = arith.addf %12, %22 : vector<128x128xf32>
    %cst_15 = arith.constant dense<0.000000e+00> : vector<128xf32>
    %24 = vector.multi_reduction <add>, %23, %cst_15 [1] : vector<128x128xf32> to vector<128xf32>
    %25 = vector.shape_cast %24 : vector<128xf32> to vector<128x1xf32>
    %26 = arith.mulf %23, %23 : vector<128x128xf32>
    %cst_16 = arith.constant dense<0.000000e+00> : vector<128xf32>
    %27 = vector.multi_reduction <add>, %26, %cst_16 [1] : vector<128x128xf32> to vector<128xf32>
    %28 = vector.shape_cast %27 : vector<128xf32> to vector<128x1xf32>
    %cst_17 = arith.constant 3.125000e-02 : f32
    %29 = vector.broadcast %cst_17 : f32 to vector<128x1xf32>
    %30 = arith.mulf %25, %29 : vector<128x1xf32>
    %cst_18 = arith.constant 3.125000e-02 : f32
    %31 = vector.broadcast %cst_18 : f32 to vector<128x1xf32>
    %32 = arith.mulf %28, %31 : vector<128x1xf32>
    %33 = arith.mulf %30, %30 : vector<128x1xf32>
    %34 = arith.subf %32, %33 : vector<128x1xf32>
    %cst_19 = arith.constant 0.000000e+00 : f32
    %35 = vector.broadcast %cst_19 : f32 to vector<128x1xf32>
    %36 = arith.maximumf %34, %35 : vector<128x1xf32>
    %cst_20 = arith.constant 9.99999974E-6 : f32
    %37 = vector.broadcast %cst_20 : f32 to vector<128x1xf32>
    %38 = arith.addf %36, %37 : vector<128x1xf32>
    %39 = math.rsqrt %38 : vector<128x1xf32>
    %40 = vector.broadcast %30 : vector<128x1xf32> to vector<128x128xf32>
    %41 = arith.subf %23, %40 : vector<128x128xf32>
    %42 = vector.broadcast %39 : vector<128x1xf32> to vector<128x128xf32>
    %43 = arith.mulf %41, %42 : vector<128x128xf32>
    %c0_21 = arith.constant 0 : index
    %c0_22 = arith.constant 0 : index
    %44 = vector.load %arg4[%c0_21, %c0_22] : memref<1x128xf32, #tpu.memory_space<vmem>>, vector<1x128xf32>
    %45 = vector.broadcast %44 : vector<1x128xf32> to vector<128x128xf32>
    %46 = arith.mulf %43, %45 : vector<128x128xf32>
    %c0_23 = arith.constant 0 : index
    %c0_24 = arith.constant 0 : index
    %47 = vector.load %arg5[%c0_23, %c0_24] : memref<1x128xf32, #tpu.memory_space<vmem>>, vector<1x128xf32>
    %48 = vector.broadcast %47 : vector<1x128xf32> to vector<128x128xf32>
    %49 = arith.addf %46, %48 : vector<128x128xf32>
    %c0_25 = arith.constant 0 : index
    %c0_26 = arith.constant 0 : index
    %50 = vector.load %arg6[%c0_25, %c0_26] : memref<128x128xf32, #tpu.memory_space<vmem>>, vector<128x128xf32>
    tpu.vector_store %arg6[%c0_25, %c0_26], %49 {strides = array<i32>} : memref<128x128xf32, #tpu.memory_space<vmem>>, vector<128x128xf32>,
    return
  }
  func.func @transform_0(%arg0: i32) -> (i32, i32) {
    %c0_i32 = arith.constant 0 : i32
    %c0_i32_0 = arith.constant 0 : i32
    return %arg0, %c0_i32 : i32, i32
  }
  func.func @transform_1(%arg0: i32) -> (i32, i32, i32) {
    %c0_i32 = arith.constant 0 : i32
    %c0_i32_0 = arith.constant 0 : i32
    %c0_i32_1 = arith.constant 0 : i32
    %c0_i32_2 = arith.constant 0 : i32
    return %c0_i32, %c0_i32_0, %c0_i32_1 : i32, i32, i32
  }
  func.func @transform_2(%arg0: i32) -> (i32, i32, i32) {
    %c0_i32 = arith.constant 0 : i32
    %c0_i32_0 = arith.constant 0 : i32
    %c0_i32_1 = arith.constant 0 : i32
    %c0_i32_2 = arith.constant 0 : i32
    return %c0_i32, %c0_i32_0, %c0_i32_1 : i32, i32, i32
  }
  func.func @transform_3(%arg0: i32) -> (i32, i32) {
    %c0_i32 = arith.constant 0 : i32
    %c0_i32_0 = arith.constant 0 : i32
    %c0_i32_1 = arith.constant 0 : i32
    return %c0_i32, %c0_i32_0 : i32, i32
  }
  func.func @transform_4(%arg0: i32) -> (i32, i32) {
    %c0_i32 = arith.constant 0 : i32
    %c0_i32_0 = arith.constant 0 : i32
    %c0_i32_1 = arith.constant 0 : i32
    return %c0_i32, %c0_i32_0 : i32, i32
  }
  func.func @transform_5(%arg0: i32) -> (i32, i32) {
    %c0_i32 = arith.constant 0 : i32
    %c0_i32_0 = arith.constant 0 : i32
    return %arg0, %c0_i32 : i32, i32
  }
}

</mosaic_0001>

<llo_original>
// kernel: tpu_custom_call.1
$region0: #{tpu_custom_call.1}
  #allocation0 [shape = 'u32[]', space=smem, size = 0x4, offset = 0x4, fixed_abs, tag = 'smem constant byte address 0x4 - core index']
  #allocation1 [shape = 'u32[144,128]{1,0:T(1,128)}', space=vmem, size = 0x12000, scoped, tag = 'internal scratch']
  %s0 = inlined_call_operand.hbm [shape: bf16[256,128], index: 0, kind: input, shape index: {}]
  %s1 = inlined_call_operand.hbm [shape: bf16[2,128,128], index: 1, kind: input, shape index: {}]
  %s2 = inlined_call_operand.vmem [shape: f32[2,1,128], index: 2, kind: input, shape index: {}]
  %s3 = inlined_call_operand.vmem [shape: f32[1,128], index: 3, kind: input, shape index: {}]
  %s4 = inlined_call_operand.vmem [shape: f32[1,128], index: 4, kind: input, shape index: {}]
  %s5 = inlined_call_operand.hbm [shape: f32[256,128], index: 5, kind: output, shape index: {}]
  %s6 = sld [smem:[#allocation0]]
  $region61: #{tpu_custom_call.1} parent=0
    _
  %s8 = ssub.s32 1, %s6
  %s9 = scalar_select 0, %s8, %s6
  $region1: #{tpu_custom_call.1} parent=0
    #allocation2 [shape = 'u8[65536]{0}', space=vmem, size = 0x10000, scoped, tag = 'input window, operand 0']
    #allocation3 [shape = 's32[2]{0}', space=sflag, size = 0x8, scoped, tag = 'scoped memory for tpu_custom_call.1']
    #allocation4 [shape = 's32[2]{0}', space=sflag, size = 0x8, scoped, tag = 'scoped memory for tpu_custom_call.1']
    #allocation5 [shape = 'u8[65536]{0}', space=vmem, size = 0x10000, scoped, tag = 'input window, operand 1, single buffered']
    #allocation6 [shape = 's32[1]{0}', space=sflag, size = 0x4, scoped, tag = 'scoped memory for tpu_custom_call.1']
    #allocation7 [shape = 'u8[131072]{0}', space=vmem, size = 0x20000, scoped, tag = 'output window, operand 0']
    %10 = vsyncpa [#allocation3], 0
    %s11 = scalar_lea.sflag [#allocation3], 1
    %12 = vsyncpa %s11, 0
    %13 = vsyncpa [#allocation6], 0
    %14 = vsyncpa [#allocation4], 0
    %s15 = scalar_lea.sflag [#allocation4], 1
    %16 = vsyncpa %s15, 0
    loop: start=0, step=1, limit=4
    $region2: #{tpu_custom_call.1} parent=1 // loop_pre_header
      _
    $region3: #{tpu_custom_call.1} parent=1 // loop_header
      %s18 = sphi 0, %s22
      %p19 = scmp.ge.s32.totalorder %s18, 4
      %s28 = sphi 0, %s30
      %s31 = sphi 0, %s28
      %s32 = sphi 0, %s31
      %s48 = sphi 0, %s32
      %s52 = sphi 0, %s52
      %s54 = sphi 0, %s52
      %s55 = sphi 0, %s54
      %s69 = sphi 0, %s55
      %s73 = sphi 0, %s73
      %s75 = sphi 0, %s73
      %s76 = sphi 0, %s75
      %s90 = sphi 0, %s76
      %s94 = sphi 0, %s94
      %s96 = sphi 0, %s94
      %s97 = sphi 0, %s96
      %s111 = sphi 0, %s97
      %s115 = sphi 0, %s115
      %s117 = sphi 0, %s115
      %s118 = sphi 0, %s117
      %s132 = sphi 0, %s118
      %s138 = sphi 0, %s140
      %s141 = sphi 0, %s138
      %s142 = sphi 0, %s141
      %s158 = sphi 0, %s142
    $region4: #{tpu_custom_call.1} parent=1 // loop_header_branch
      %21 = sbr.rel (%p19) target = $region8
    $region5: #{tpu_custom_call.1} parent=1 // loop_body
      %s23 = ssub.s32 %s18, 1
      %s24 = ssub.s32 %s18, 2
      %s25 = sadd.s32 %s18, 1
      %s26 = ssub.s32 %s18, %s25
      %p27 = scmp.eq.s32.totalorder %s26, 0
      %s29 = sadd.s32 %s28, 1
      %s30 = scalar_select %p27, %s28, %s29
      %p33 = pneg %p27
      %p34 = scmp.eq.s32.totalorder %s18, 1
      %p35 = por %p33, %p34
      %p36 = scmp.ne.s32.totalorder %s28, %s31
      %p37 = scmp.eq.s32.totalorder %s18, 0
      %p38 = por %p36, %p37
      %p39 = scmp.ne.s32.totalorder %s28, %s31
      %p40 = scmp.eq.s32.totalorder %s23, 1
      %p41 = por %p39, %p40
      %p42 = scmp.ne.s32.totalorder %s31, %s32
      %p43 = scmp.eq.s32.totalorder %s23, 0
      %p44 = por %p42, %p43
      %p45 = scmp.ne.s32.totalorder %s31, %s32
      %p46 = scmp.eq.s32.totalorder %s24, 1
      %p47 = por %p45, %p46
      %p49 = scmp.ne.s32.totalorder %s32, %s48
      %p50 = scmp.eq.s32.totalorder %s24, 0
      %p51 = por %p49, %p50
      %s53 = sadd.s32 %s52, 1
      %p56 = scmp.eq.s32.totalorder %s18, 1
      %p57 = scmp.ne.s32.totalorder %s52, %s54
      %p58 = scmp.eq.s32.totalorder %s18, 0
      %p59 = por %p57, %p58
      %p60 = scmp.ne.s32.totalorder %s52, %s54
      %p61 = scmp.eq.s32.totalorder %s23, 1
      %p62 = por %p60, %p61
      %p63 = scmp.ne.s32.totalorder %s54, %s55
      %p64 = scmp.eq.s32.totalorder %s23, 0
      %p65 = por %p63, %p64
      %p66 = scmp.ne.s32.totalorder %s54, %s55
      %p67 = scmp.eq.s32.totalorder %s24, 1
      %p68 = por %p66, %p67
      %p70 = scmp.ne.s32.totalorder %s55, %s69
      %p71 = scmp.eq.s32.totalorder %s24, 0
      %p72 = por %p70, %p71
      %s74 = sadd.s32 %s73, 1
      %p77 = scmp.eq.s32.totalorder %s18, 1
      %p78 = scmp.ne.s32.totalorder %s73, %s75
      %p79 = scmp.eq.s32.totalorder %s18, 0
      %p80 = por %p78, %p79
      %p81 = scmp.ne.s32.totalorder %s73, %s75
      %p82 = scmp.eq.s32.totalorder %s23, 1
      %p83 = por %p81, %p82
      %p84 = scmp.ne.s32.totalorder %s75, %s76
      %p85 = scmp.eq.s32.totalorder %s23, 0
      %p86 = por %p84, %p85
      %p87 = scmp.ne.s32.totalorder %s75, %s76
      %p88 = scmp.eq.s32.totalorder %s24, 1
      %p89 = por %p87, %p88
      %p91 = scmp.ne.s32.totalorder %s76, %s90
      %p92 = scmp.eq.s32.totalorder %s24, 0
      %p93 = por %p91, %p92
      %s95 = sadd.s32 %s94, 1
      %p98 = scmp.eq.s32.totalorder %s18, 1
      %p99 = scmp.ne.s32.totalorder %s94, %s96
      %p100 = scmp.eq.s32.totalorder %s18, 0
      %p101 = por %p99, %p100
      %p102 = scmp.ne.s32.totalorder %s94, %s96
      %p103 = scmp.eq.s32.totalorder %s23, 1
      %p104 = por %p102, %p103
      %p105 = scmp.ne.s32.totalorder %s96, %s97
      %p106 = scmp.eq.s32.totalorder %s23, 0
      %p107 = por %p105, %p106
      %p108 = scmp.ne.s32.totalorder %s96, %s97
      %p109 = scmp.eq.s32.totalorder %s24, 1
      %p110 = por %p108, %p109
      %p112 = scmp.ne.s32.totalorder %s97, %s111
      %p113 = scmp.eq.s32.totalorder %s24, 0
      %p114 = por %p112, %p113
      %s116 = sadd.s32 %s115, 1
      %p119 = scmp.eq.s32.totalorder %s18, 1
      %p120 = scmp.ne.s32.totalorder %s115, %s117
      %p121 = scmp.eq.s32.totalorder %s18, 0
      %p122 = por %p120, %p121
      %p123 = scmp.ne.s32.totalorder %s115, %s117
      %p124 = scmp.eq.s32.totalorder %s23, 1
      %p125 = por %p123, %p124
      %p126 = scmp.ne.s32.totalorder %s117, %s118
      %p127 = scmp.eq.s32.totalorder %s23, 0
      %p128 = por %p126, %p127
      %p129 = scmp.ne.s32.totalorder %s117, %s118
      %p130 = scmp.eq.s32.totalorder %s24, 1
      %p131 = por %p129, %p130
      %p133 = scmp.ne.s32.totalorder %s118, %s132
      %p134 = scmp.eq.s32.totalorder %s24, 0
      %p135 = por %p133, %p134
      %s136 = ssub.s32 %s18, %s25
      %p137 = scmp.eq.s32.totalorder %s136, 0
      %s139 = sadd.s32 %s138, 1
      %s140 = scalar_select %p137, %s138, %s139
      %p143 = pneg %p137
      %p144 = scmp.eq.s32.totalorder %s18, 1
      %p145 = por %p143, %p144
      %p146 = scmp.ne.s32.totalorder %s138, %s141
      %p147 = scmp.eq.s32.totalorder %s18, 0
      %p148 = por %p146, %p147
      %p149 = scmp.ne.s32.totalorder %s138, %s141
      %p150 = scmp.eq.s32.totalorder %s23, 1
      %p151 = por %p149, %p150
      %p152 = scmp.ne.s32.totalorder %s141, %s142
      %p153 = scmp.eq.s32.totalorder %s23, 0
      %p154 = por %p152, %p153
      %p155 = scmp.ne.s32.totalorder %s141, %s142
      %p156 = scmp.eq.s32.totalorder %s24, 1
      %p157 = por %p155, %p156
      %p159 = scmp.ne.s32.totalorder %s142, %s158
      %p160 = scmp.eq.s32.totalorder %s24, 0
      %p161 = por %p159, %p160
      %p162 = scmp.le.s32.totalorder 1, %s18
      %p163 = scmp.lt.s32.totalorder %s18, 3
      %p164 = pnand %p162, %p163
      %p165 = pneg %p164
      // Predicated region
      $region9: #{tpu_custom_call.1} parent=5 // pred_check
        _
      $region10: #{tpu_custom_call.1} parent=5 // pred_check_branch
        %167 = sbr.rel (%p164) target = $region12
      $region11: #{tpu_custom_call.1} parent=5 // pred_region
        %s168 = ssub.s32 %s18, 1
        // Predicated region
        $region13: #{tpu_custom_call.1} parent=11 // pred_check
          %p169 = pneg %p65
        $region14: #{tpu_custom_call.1} parent=11 // pred_check_branch
          %171 = sbr.rel (%p169) target = $region16
        $region15: #{tpu_custom_call.1} parent=11 // pred_region
          %s173 = ssub.s32 2048, 2048
          %174 = vsyncadd [#allocation6], %s173
          %s175 = sshll.u32 [#allocation5], 4
          %s176 = int_to_ptr.vmem [resolvable:$true] %s175
          %181 = dma.hbm_to_vmem [thread:$0]  %s1, 2048, %s176, [#allocation6], 64, 64, 4
        $region16: #{tpu_custom_call.1} parent=11 // pred_fallthru
          _
        // Predicated region
        $region17: #{tpu_custom_call.1} parent=11 // pred_check
          %p182 = pneg %p86
        $region18: #{tpu_custom_call.1} parent=11 // pred_check_branch
          %184 = sbr.rel (%p182) target = $region20
        $region19: #{tpu_custom_call.1} parent=11 // pred_region
          _
        $region20: #{tpu_custom_call.1} parent=11 // pred_fallthru
          _
        // Predicated region
        $region21: #{tpu_custom_call.1} parent=11 // pred_check
          %p185 = pneg %p107
        $region22: #{tpu_custom_call.1} parent=11 // pred_check_branch
          %187 = sbr.rel (%p185) target = $region24
        $region23: #{tpu_custom_call.1} parent=11 // pred_region
          _
        $region24: #{tpu_custom_call.1} parent=11 // pred_fallthru
          _
        // Predicated region
        $region25: #{tpu_custom_call.1} parent=11 // pred_check
          %p188 = pneg %p128
        $region26: #{tpu_custom_call.1} parent=11 // pred_check_branch
          %190 = sbr.rel (%p188) target = $region28
        $region27: #{tpu_custom_call.1} parent=11 // pred_region
          _
        $region28: #{tpu_custom_call.1} parent=11 // pred_fallthru
          _
      $region12: #{tpu_custom_call.1} parent=5 // pred_fallthru
        _
      %p191 = scmp.lt.s32.totalorder %s18, 2
      // Predicated region
      $region29: #{tpu_custom_call.1} parent=5 // pred_check
        %p192 = pneg %p191
      $region30: #{tpu_custom_call.1} parent=5 // pred_check_branch
        %194 = sbr.rel (%p192) target = $region32
      $region31: #{tpu_custom_call.1} parent=5 // pred_region
        // Predicated region
        $region33: #{tpu_custom_call.1} parent=31 // pred_check
          %p195 = pneg %p38
        $region34: #{tpu_custom_call.1} parent=31 // pred_check_branch
          %197 = sbr.rel (%p195) target = $region36
        $region35: #{tpu_custom_call.1} parent=31 // pred_region
          %s198 = sand.u32 %s28, 1
          %s199 = scalar_lea.sflag [#allocation3], %s198
          %s200 = sand.u32 %s28, 1
          %s201 = smul.addr %s200, 64
          %s202 = scalar_lea.vmem [#allocation2], %s201
          %s203 = smul.u32 16, %s18
          %s205 = ssub.s32 1024, 1024
          %206 = vsyncadd %s199, %s205
          %s207 = smul.addr %s203, 64
          %s208 = scalar_lea.hbm %s0, %s207
          %s209 = sshll.u32 %s202, 4
          %s210 = int_to_ptr.vmem [resolvable:$true] %s209
          %215 = dma.hbm_to_vmem [thread:$0]  %s208, 1024, %s210, %s199, 64, 64, 4
        $region36: #{tpu_custom_call.1} parent=31 // pred_fallthru
          _
      $region32: #{tpu_custom_call.1} parent=5 // pred_fallthru
        _
      %p216 = scmp.le.s32.totalorder 1, %s18
      %p217 = scmp.lt.s32.totalorder %s18, 3
      %p218 = pnand %p216, %p217
      %p219 = pneg %p218
      // Predicated region
      $region37: #{tpu_custom_call.1} parent=5 // pred_check
        _
      $region38: #{tpu_custom_call.1} parent=5 // pred_check_branch
        %221 = sbr.rel (%p218) target = $region40
      $region39: #{tpu_custom_call.1} parent=5 // pred_region
        %s222 = ssub.s32 %s18, 1
        %s223 = sand.u32 %s31, 1
        %s224 = scalar_lea.sflag [#allocation3], %s223
        %s225 = sand.u32 %s31, 1
        %s226 = smul.addr %s225, 64
        %s227 = scalar_lea.vmem [#allocation2], %s226
        // Predicated region
        $region41: #{tpu_custom_call.1} parent=39 // pred_check
          %p228 = pneg %p44
        $region42: #{tpu_custom_call.1} parent=39 // pred_check_branch
          %230 = sbr.rel (%p228) target = $region44
        $region43: #{tpu_custom_call.1} parent=39 // pred_region
          %231 = dma.done %s224, 1024
        $region44: #{tpu_custom_call.1} parent=39 // pred_fallthru
          _
        // Predicated region
        $region45: #{tpu_custom_call.1} parent=39 // pred_check
          %p232 = pneg %p65
        $region46: #{tpu_custom_call.1} parent=39 // pred_check_branch
          %234 = sbr.rel (%p232) target = $region48
        $region47: #{tpu_custom_call.1} parent=39 // pred_region
          %235 = dma.done [#allocation6], 2048
        $region48: #{tpu_custom_call.1} parent=39 // pred_fallthru
          _
        %s236 = sand.u32 %s31, 1
        %s237 = scalar_lea.sflag [#allocation3], %s236
        %s238 = sand.u32 %s31, 1
        %s239 = smul.addr %s238, 64
        %s240 = scalar_lea.vmem [#allocation2], %s239
        %p241 = pneg %p44
        %p242 = pneg %p41
        %p243 = pneg %p65
        %p244 = pneg %p62
        %p245 = pneg %p86
        %p246 = pneg %p83
        %p247 = pneg %p107
        %p248 = pneg %p104
        %p249 = pneg %p128
        %p250 = pneg %p125
        %p251 = pneg %p154
        %p252 = pneg %p151
        %s253 = sand.u32 %s141, 1
        %s254 = scalar_lea.sflag [#allocation4], %s253
        %s255 = sand.u32 %s141, 1
        %s256 = smul.addr %s255, 128
        %s257 = scalar_lea.vmem [#allocation7], %s256
        %s258 = smul.u32 16, %s23
        %s259 = smul.u32 16, %s23
        %v261 = vld [vmem:[%s227] sm:$0xf]
        %v262 = vld [vmem:[%s227 + $0x4] sm:$0xf]
        %v263 = vld [vmem:[%s227 + $0x8] sm:$0xf]
        %v264 = vld [vmem:[%s227 + $0xc] sm:$0xf]
        %v265 = vld [vmem:[%s227 + $0x10] sm:$0xf]
        %v266 = vld [vmem:[%s227 + $0x14] sm:$0xf]
        %v267 = vld [vmem:[%s227 + $0x18] sm:$0xf]
        %v268 = vld [vmem:[%s227 + $0x1c] sm:$0xf]
        %v269 = vld [vmem:[%s227 + $0x20] sm:$0xf]
        %v270 = vld [vmem:[%s227 + $0x24] sm:$0xf]
        %v271 = vld [vmem:[%s227 + $0x28] sm:$0xf]
        %v272 = vld [vmem:[%s227 + $0x2c] sm:$0xf]
        %v273 = vld [vmem:[%s227 + $0x30] sm:$0xf]
        %v274 = vld [vmem:[%s227 + $0x34] sm:$0xf]
        %v275 = vld [vmem:[%s227 + $0x38] sm:$0xf]
        %v276 = vld [vmem:[%s227 + $0x3c] sm:$0xf]
        %v277 = vunpack.c.l.bf16 %v261
        %v278 = vunpack.c.l.bf16 %v262
        %v279 = vunpack.c.l.bf16 %v263
        %v280 = vunpack.c.l.bf16 %v264
        %v281 = vunpack.c.l.bf16 %v265
        %v282 = vunpack.c.l.bf16 %v266
        %v283 = vunpack.c.l.bf16 %v267
        %v284 = vunpack.c.l.bf16 %v268
        %v285 = vunpack.c.l.bf16 %v269
        %v286 = vunpack.c.l.bf16 %v270
        %v287 = vunpack.c.l.bf16 %v271
        %v288 = vunpack.c.l.bf16 %v272
        %v289 = vunpack.c.l.bf16 %v273
        %v290 = vunpack.c.l.bf16 %v274
        %v291 = vunpack.c.l.bf16 %v275
        %v292 = vunpack.c.l.bf16 %v276
        %v293 = vld [vmem:[#allocation5] sm:$0xf]
        %v294 = vld [vmem:[#allocation5 + $0x4] sm:$0xf]
        %v295 = vld [vmem:[#allocation5 + $0x8] sm:$0xf]
        %v296 = vld [vmem:[#allocation5 + $0xc] sm:$0xf]
        %v297 = vld [vmem:[#allocation5 + $0x10] sm:$0xf]
        %v298 = vld [vmem:[#allocation5 + $0x14] sm:$0xf]
        %v299 = vld [vmem:[#allocation5 + $0x18] sm:$0xf]
        %v300 = vld [vmem:[#allocation5 + $0x1c] sm:$0xf]
        %v301 = vld [vmem:[#allocation5 + $0x20] sm:$0xf]
        %v302 = vld [vmem:[#allocation5 + $0x24] sm:$0xf]
        %v303 = vld [vmem:[#allocation5 + $0x28] sm:$0xf]
        %v304 = vld [vmem:[#allocation5 + $0x2c] sm:$0xf]
        %v305 = vld [vmem:[#allocation5 + $0x30] sm:$0xf]
        %v306 = vld [vmem:[#allocation5 + $0x34] sm:$0xf]
        %v307 = vld [vmem:[#allocation5 + $0x38] sm:$0xf]
        %v308 = vld [vmem:[#allocation5 + $0x3c] sm:$0xf]
        %v309 = vld [vmem:[%s2] sm:$0x1]
        %v311 = vlaneseq
        %v312 = vshrl.u32 %v311, 7
        %v313 = vsub.s32 0, %v312
        %v314 = vrot.slane %v309, %v313
        %v332 = vunpack.c.l.b16 %v261
        %v333 = vunpack.c.l.b16 %v262
        %v334 = vunpack.c.l.b16 %v263
        %v335 = vunpack.c.l.b16 %v264
        %v336 = vunpack.c.l.b16 %v265
        %v337 = vunpack.c.l.b16 %v266
        %v338 = vunpack.c.l.b16 %v267
        %v339 = vunpack.c.l.b16 %v268
        %v340 = vunpack.c.l.b16 %v269
        %v341 = vunpack.c.l.b16 %v270
        %v342 = vunpack.c.l.b16 %v271
        %v343 = vunpack.c.l.b16 %v272
        %v344 = vunpack.c.l.b16 %v273
        %v345 = vunpack.c.l.b16 %v274
        %v346 = vunpack.c.l.b16 %v275
        %v347 = vunpack.c.l.b16 %v276
        %v348 = vpack.c.b16 %v333, %v332
        %v349 = vpack.c.b16 %v335, %v334
        %v350 = vpack.c.b16 %v337, %v336
        %v351 = vpack.c.b16 %v339, %v338
        %v352 = vpack.c.b16 %v341, %v340
        %v353 = vpack.c.b16 %v343, %v342
        %v354 = vpack.c.b16 %v345, %v344
        %v355 = vpack.c.b16 %v347, %v346
        %v380 = vunpack.c.l.b16 %v293
        %v381 = vunpack.c.l.b16 %v294
        %v382 = vunpack.c.l.b16 %v295
        %v383 = vunpack.c.l.b16 %v296
        %v384 = vunpack.c.l.b16 %v297
        %v385 = vunpack.c.l.b16 %v298
        %v386 = vunpack.c.l.b16 %v299
        %v387 = vunpack.c.l.b16 %v300
        %v388 = vunpack.c.l.b16 %v301
        %v389 = vunpack.c.l.b16 %v302
        %v390 = vunpack.c.l.b16 %v303
        %v391 = vunpack.c.l.b16 %v304
        %v392 = vunpack.c.l.b16 %v305
        %v393 = vunpack.c.l.b16 %v306
        %v394 = vunpack.c.l.b16 %v307
        %v395 = vunpack.c.l.b16 %v308
        %v396 = vpack.c.b16 %v381, %v380
        %v397 = vpack.c.b16 %v383, %v382
        %v398 = vpack.c.b16 %v385, %v384
        %v399 = vpack.c.b16 %v387, %v386
        %v400 = vpack.c.b16 %v389, %v388
        %v401 = vpack.c.b16 %v391, %v390
        %v402 = vpack.c.b16 %v393, %v392
        %v403 = vpack.c.b16 %v395, %v394
        %412 = vmatprep.subr.bf16.mxu0 0
        %413 = vmatpush1.bf16.msra.mxu0 %v403
        %414 = vmatprep.subr.bf16.mxu0 0
        %415 = vmatpush1.bf16.msra.mxu0 %v402
        %416 = vmatprep.subr.bf16.mxu0 0
        %417 = vmatpush1.bf16.msra.mxu0 %v401
        %418 = vmatprep.subr.bf16.mxu0 0
        %419 = vmatpush1.bf16.msra.mxu0 %v400
        %420 = vmatprep.subr.bf16.mxu0 0
        %421 = vmatpush1.bf16.msra.mxu0 %v399
        %422 = vmatprep.subr.bf16.mxu0 0
        %423 = vmatpush1.bf16.msra.mxu0 %v398
        %424 = vmatprep.subr.bf16.mxu0 0
        %425 = vmatpush1.bf16.msra.mxu0 %v397
        %426 = vmatprep.subr.bf16.mxu0 0
        %427 = vmatpush1.bf16.msra.mxu0 %v396
        %428 = vmatprep.subr.bf16.mxu0 0
        %429 = vmatpush2.bf16.msra.mxu0 0
        %430 = vmatprep.subr.bf16.mxu0 0
        %431 = vmatpush2.bf16.msra.mxu0 0
        %432 = vmatprep.subr.bf16.mxu0 0
        %433 = vmatpush2.bf16.msra.mxu0 0
        %434 = vmatprep.subr.bf16.mxu0 0
        %435 = vmatpush2.bf16.msra.mxu0 0
        %436 = vmatprep.subr.bf16.mxu0 0
        %437 = vmatpush2.bf16.msra.mxu0 0
        %438 = vmatprep.subr.bf16.mxu0 0
        %439 = vmatpush2.bf16.msra.mxu0 0
        %440 = vmatprep.subr.bf16.mxu0 0
        %441 = vmatpush2.bf16.msra.mxu0 0
        %442 = vmatprep.subr.bf16.mxu0 0
        %443 = vmatpush2.bf16.msra.mxu0 0
        %444 = vmatprep.mubr.bf16.mxu0 0
        %445 = vmatmul.mubr.bf16.gmra.mxu0 %v348
        %v446 = vpop.f32.mrf.mxu0
        %v447 = vadd.f32 %v314, %v446
        %v448 = vpop.f32.mrf.mxu0
        %v449 = vpop.f32.mrf.mxu0
        %v450 = vadd.f32 %v314, %v449
        %v451 = vpop.f32.mrf.mxu0
        %452 = vmatprep.mubr.bf16.mxu0 0
        %453 = vmatmul.mubr.bf16.gmra.mxu0 %v349
        %v454 = vpop.f32.mrf.mxu0
        %v455 = vadd.f32 %v314, %v454
        %v456 = vpop.f32.mrf.mxu0
        %v457 = vpop.f32.mrf.mxu0
        %v458 = vadd.f32 %v314, %v457
        %v459 = vpop.f32.mrf.mxu0
        %460 = vmatprep.mubr.bf16.mxu0 0
        %461 = vmatmul.mubr.bf16.gmra.mxu0 %v350
        %v462 = vpop.f32.mrf.mxu0
        %v463 = vadd.f32 %v314, %v462
        %v464 = vpop.f32.mrf.mxu0
        %v465 = vpop.f32.mrf.mxu0
        %v466 = vadd.f32 %v314, %v465
        %v467 = vpop.f32.mrf.mxu0
        %468 = vmatprep.mubr.bf16.mxu0 0
        %469 = vmatmul.mubr.bf16.gmra.mxu0 %v351
        %v470 = vpop.f32.mrf.mxu0
        %v471 = vadd.f32 %v314, %v470
        %v472 = vpop.f32.mrf.mxu0
        %v473 = vpop.f32.mrf.mxu0
        %v474 = vadd.f32 %v314, %v473
        %v475 = vpop.f32.mrf.mxu0
        %476 = vmatprep.mubr.bf16.mxu0 0
        %477 = vmatmul.mubr.bf16.gmra.mxu0 %v352
        %v478 = vpop.f32.mrf.mxu0
        %v479 = vadd.f32 %v314, %v478
        %v480 = vpop.f32.mrf.mxu0
        %v481 = vpop.f32.mrf.mxu0
        %v482 = vadd.f32 %v314, %v481
        %v483 = vpop.f32.mrf.mxu0
        %484 = vmatprep.mubr.bf16.mxu0 0
        %485 = vmatmul.mubr.bf16.gmra.mxu0 %v353
        %v486 = vpop.f32.mrf.mxu0
        %v487 = vadd.f32 %v314, %v486
        %v488 = vpop.f32.mrf.mxu0
        %v489 = vpop.f32.mrf.mxu0
        %v490 = vadd.f32 %v314, %v489
        %v491 = vpop.f32.mrf.mxu0
        %492 = vmatprep.mubr.bf16.mxu0 0
        %493 = vmatmul.mubr.bf16.gmra.mxu0 %v354
        %v494 = vpop.f32.mrf.mxu0
        %v495 = vadd.f32 %v314, %v494
        %v496 = vpop.f32.mrf.mxu0
        %v497 = vpop.f32.mrf.mxu0
        %v498 = vadd.f32 %v314, %v497
        %v499 = vpop.f32.mrf.mxu0
        %500 = vmatprep.mubr.bf16.mxu0 0
        %501 = vmatmul.mubr.bf16.gmra.mxu0 %v355
        %v502 = vpop.f32.mrf.mxu0
        %v503 = vadd.f32 %v314, %v502
        %v504 = vpop.f32.mrf.mxu0
        %v505 = vpop.f32.mrf.mxu0
        %v506 = vadd.f32 %v314, %v505
        %v507 = vpop.f32.mrf.mxu0
        %508 = vdwg.mxu0
        %v509 = vmax.f32 %v447, 0.0
        %v510 = vmax.f32 %v450, 0.0
        %v511 = vmax.f32 %v455, 0.0
        %v512 = vmax.f32 %v458, 0.0
        %v513 = vmax.f32 %v463, 0.0
        %v514 = vmax.f32 %v466, 0.0
        %v515 = vmax.f32 %v471, 0.0
        %v516 = vmax.f32 %v474, 0.0
        %v517 = vmax.f32 %v479, 0.0
        %v518 = vmax.f32 %v482, 0.0
        %v519 = vmax.f32 %v487, 0.0
        %v520 = vmax.f32 %v490, 0.0
        %v521 = vmax.f32 %v495, 0.0
        %v522 = vmax.f32 %v498, 0.0
        %v523 = vmax.f32 %v503, 0.0
        %v524 = vmax.f32 %v506, 0.0
        %v525 = vadd.f32 %v277, %v509
        %v526 = vadd.f32 %v278, %v510
        %v527 = vadd.f32 %v279, %v511
        %v528 = vadd.f32 %v280, %v512
        %v529 = vadd.f32 %v281, %v513
        %v530 = vadd.f32 %v282, %v514
        %v531 = vadd.f32 %v283, %v515
        %v532 = vadd.f32 %v284, %v516
        %v533 = vadd.f32 %v285, %v517
        %v534 = vadd.f32 %v286, %v518
        %v535 = vadd.f32 %v287, %v519
        %v536 = vadd.f32 %v288, %v520
        %v537 = vadd.f32 %v289, %v521
        %v538 = vadd.f32 %v290, %v522
        %v539 = vadd.f32 %v291, %v523
        %v540 = vadd.f32 %v292, %v524
        %s541 = scalar_lea.vmem [#allocation5], 64
        %v542 = vld [vmem:[%s541] sm:$0xf]
        %v543 = vld [vmem:[%s541 + $0x4] sm:$0xf]
        %v544 = vld [vmem:[%s541 + $0x8] sm:$0xf]
        %v545 = vld [vmem:[%s541 + $0xc] sm:$0xf]
        %v546 = vld [vmem:[%s541 + $0x10] sm:$0xf]
        %v547 = vld [vmem:[%s541 + $0x14] sm:$0xf]
        %v548 = vld [vmem:[%s541 + $0x18] sm:$0xf]
        %v549 = vld [vmem:[%s541 + $0x1c] sm:$0xf]
        %v550 = vld [vmem:[%s541 + $0x20] sm:$0xf]
        %v551 = vld [vmem:[%s541 + $0x24] sm:$0xf]
        %v552 = vld [vmem:[%s541 + $0x28] sm:$0xf]
        %v553 = vld [vmem:[%s541 + $0x2c] sm:$0xf]
        %v554 = vld [vmem:[%s541 + $0x30] sm:$0xf]
        %v555 = vld [vmem:[%s541 + $0x34] sm:$0xf]
        %v556 = vld [vmem:[%s541 + $0x38] sm:$0xf]
        %v557 = vld [vmem:[%s541 + $0x3c] sm:$0xf]
        %s558 = scalar_lea.vmem %s2, 1
        %v559 = vld [vmem:[%s558] sm:$0x1]
        %v560 = vpack.c.bf16 %v526, %v525
        %v561 = vpack.c.bf16 %v528, %v527
        %v562 = vpack.c.bf16 %v530, %v529
        %v563 = vpack.c.bf16 %v532, %v531
        %v564 = vpack.c.bf16 %v534, %v533
        %v565 = vpack.c.bf16 %v536, %v535
        %v566 = vpack.c.bf16 %v538, %v537
        %v567 = vpack.c.bf16 %v540, %v539
        %v569 = vlaneseq
        %v570 = vshrl.u32 %v569, 7
        %v571 = vsub.s32 0, %v570
        %v572 = vrot.slane %v559, %v571
        %v590 = vunpack.c.l.b16 %v542
        %v591 = vunpack.c.l.b16 %v543
        %v592 = vunpack.c.l.b16 %v544
        %v593 = vunpack.c.l.b16 %v545
        %v594 = vunpack.c.l.b16 %v546
        %v595 = vunpack.c.l.b16 %v547
        %v596 = vunpack.c.l.b16 %v548
        %v597 = vunpack.c.l.b16 %v549
        %v598 = vunpack.c.l.b16 %v550
        %v599 = vunpack.c.l.b16 %v551
        %v600 = vunpack.c.l.b16 %v552
        %v601 = vunpack.c.l.b16 %v553
        %v602 = vunpack.c.l.b16 %v554
        %v603 = vunpack.c.l.b16 %v555
        %v604 = vunpack.c.l.b16 %v556
        %v605 = vunpack.c.l.b16 %v557
        %v606 = vpack.c.b16 %v591, %v590
        %v607 = vpack.c.b16 %v593, %v592
        %v608 = vpack.c.b16 %v595, %v594
        %v609 = vpack.c.b16 %v597, %v596
        %v610 = vpack.c.b16 %v599, %v598
        %v611 = vpack.c.b16 %v601, %v600
        %v612 = vpack.c.b16 %v603, %v602
        %v613 = vpack.c.b16 %v605, %v604
        %622 = vmatprep.subr.bf16.mxu0 0
        %623 = vmatpush1.bf16.msra.mxu0 %v613
        %624 = vmatprep.subr.bf16.mxu0 0
        %625 = vmatpush1.bf16.msra.mxu0 %v612
        %626 = vmatprep.subr.bf16.mxu0 0
        %627 = vmatpush1.bf16.msra.mxu0 %v611
        %628 = vmatprep.subr.bf16.mxu0 0
        %629 = vmatpush1.bf16.msra.mxu0 %v610
        %630 = vmatprep.subr.bf16.mxu0 0
        %631 = vmatpush1.bf16.msra.mxu0 %v609
        %632 = vmatprep.subr.bf16.mxu0 0
        %633 = vmatpush1.bf16.msra.mxu0 %v608
        %634 = vmatprep.subr.bf16.mxu0 0
        %635 = vmatpush1.bf16.msra.mxu0 %v607
        %636 = vmatprep.subr.bf16.mxu0 0
        %637 = vmatpush1.bf16.msra.mxu0 %v606
        %638 = vmatprep.subr.bf16.mxu0 0
        %639 = vmatpush2.bf16.msra.mxu0 0
        %640 = vmatprep.subr.bf16.mxu0 0
        %641 = vmatpush2.bf16.msra.mxu0 0
        %642 = vmatprep.subr.bf16.mxu0 0
        %643 = vmatpush2.bf16.msra.mxu0 0
        %644 = vmatprep.subr.bf16.mxu0 0
        %645 = vmatpush2.bf16.msra.mxu0 0
        %646 = vmatprep.subr.bf16.mxu0 0
        %647 = vmatpush2.bf16.msra.mxu0 0
        %648 = vmatprep.subr.bf16.mxu0 0
        %649 = vmatpush2.bf16.msra.mxu0 0
        %650 = vmatprep.subr.bf16.mxu0 0
        %651 = vmatpush2.bf16.msra.mxu0 0
        %652 = vmatprep.subr.bf16.mxu0 0
        %653 = vmatpush2.bf16.msra.mxu0 0
        %654 = vmatprep.mubr.bf16.mxu0 0
        %655 = vmatmul.mubr.bf16.gmra.mxu0 %v560
        %v656 = vpop.f32.mrf.mxu0
        %v657 = vadd.f32 %v572, %v656
        %v658 = vpop.f32.mrf.mxu0
        %v659 = vpop.f32.mrf.mxu0
        %v660 = vadd.f32 %v572, %v659
        %v661 = vpop.f32.mrf.mxu0
        %662 = vmatprep.mubr.bf16.mxu0 0
        %663 = vmatmul.mubr.bf16.gmra.mxu0 %v561
        %v664 = vpop.f32.mrf.mxu0
        %v665 = vadd.f32 %v572, %v664
        %v666 = vpop.f32.mrf.mxu0
        %v667 = vpop.f32.mrf.mxu0
        %v668 = vadd.f32 %v572, %v667
        %v669 = vpop.f32.mrf.mxu0
        %670 = vmatprep.mubr.bf16.mxu0 0
        %671 = vmatmul.mubr.bf16.gmra.mxu0 %v562
        %v672 = vpop.f32.mrf.mxu0
        %v673 = vadd.f32 %v572, %v672
        %v674 = vpop.f32.mrf.mxu0
        %v675 = vpop.f32.mrf.mxu0
        %v676 = vadd.f32 %v572, %v675
        %v677 = vpop.f32.mrf.mxu0
        %678 = vmatprep.mubr.bf16.mxu0 0
        %679 = vmatmul.mubr.bf16.gmra.mxu0 %v563
        %v680 = vpop.f32.mrf.mxu0
        %v681 = vadd.f32 %v572, %v680
        %v682 = vpop.f32.mrf.mxu0
        %v683 = vpop.f32.mrf.mxu0
        %v684 = vadd.f32 %v572, %v683
        %v685 = vpop.f32.mrf.mxu0
        %686 = vmatprep.mubr.bf16.mxu0 0
        %687 = vmatmul.mubr.bf16.gmra.mxu0 %v564
        %v688 = vpop.f32.mrf.mxu0
        %v689 = vadd.f32 %v572, %v688
        %v690 = vpop.f32.mrf.mxu0
        %v691 = vpop.f32.mrf.mxu0
        %v692 = vadd.f32 %v572, %v691
        %v693 = vpop.f32.mrf.mxu0
        %694 = vmatprep.mubr.bf16.mxu0 0
        %695 = vmatmul.mubr.bf16.gmra.mxu0 %v565
        %v696 = vpop.f32.mrf.mxu0
        %v697 = vadd.f32 %v572, %v696
        %v698 = vpop.f32.mrf.mxu0
        %v699 = vpop.f32.mrf.mxu0
        %v700 = vadd.f32 %v572, %v699
        %v701 = vpop.f32.mrf.mxu0
        %702 = vmatprep.mubr.bf16.mxu0 0
        %703 = vmatmul.mubr.bf16.gmra.mxu0 %v566
        %v704 = vpop.f32.mrf.mxu0
        %v705 = vadd.f32 %v572, %v704
        %v706 = vpop.f32.mrf.mxu0
        %v707 = vpop.f32.mrf.mxu0
        %v708 = vadd.f32 %v572, %v707
        %v709 = vpop.f32.mrf.mxu0
        %710 = vmatprep.mubr.bf16.mxu0 0
        %711 = vmatmul.mubr.bf16.gmra.mxu0 %v567
        %v712 = vpop.f32.mrf.mxu0
        %v713 = vadd.f32 %v572, %v712
        %v714 = vpop.f32.mrf.mxu0
        %v715 = vpop.f32.mrf.mxu0
        %v716 = vadd.f32 %v572, %v715
        %v717 = vpop.f32.mrf.mxu0
        %718 = vdwg.mxu0
        %v719 = vmax.f32 %v657, 0.0
        %v720 = vmax.f32 %v660, 0.0
        %v721 = vmax.f32 %v665, 0.0
        %v722 = vmax.f32 %v668, 0.0
        %v723 = vmax.f32 %v673, 0.0
        %v724 = vmax.f32 %v676, 0.0
        %v725 = vmax.f32 %v681, 0.0
        %v726 = vmax.f32 %v684, 0.0
        %v727 = vmax.f32 %v689, 0.0
        %v728 = vmax.f32 %v692, 0.0
        %v729 = vmax.f32 %v697, 0.0
        %v730 = vmax.f32 %v700, 0.0
        %v731 = vmax.f32 %v705, 0.0
        %v732 = vmax.f32 %v708, 0.0
        %v733 = vmax.f32 %v713, 0.0
        %v734 = vmax.f32 %v716, 0.0
        %v735 = vadd.f32 %v525, %v719
        %v736 = vadd.f32 %v526, %v720
        %v737 = vadd.f32 %v527, %v721
        %v738 = vadd.f32 %v528, %v722
        %v739 = vadd.f32 %v529, %v723
        %v740 = vadd.f32 %v530, %v724
        %v741 = vadd.f32 %v531, %v725
        %v742 = vadd.f32 %v532, %v726
        %v743 = vadd.f32 %v533, %v727
        %v744 = vadd.f32 %v534, %v728
        %v745 = vadd.f32 %v535, %v729
        %v746 = vadd.f32 %v536, %v730
        %v747 = vadd.f32 %v537, %v731
        %v748 = vadd.f32 %v538, %v732
        %v749 = vadd.f32 %v539, %v733
        %v750 = vadd.f32 %v540, %v734
        %751 = vadd.xlane.f32.xlu0 %v735
        %v752 = vpop.xlane.xlu0 %751
        %753 = vadd.xlane.f32.xlu0 %v736
        %v754 = vpop.xlane.xlu0 %753
        %755 = vadd.xlane.f32.xlu0 %v737
        %v756 = vpop.xlane.xlu0 %755
        %757 = vadd.xlane.f32.xlu0 %v738
        %v758 = vpop.xlane.xlu0 %757
        %759 = vadd.xlane.f32.xlu0 %v739
        %v760 = vpop.xlane.xlu0 %759
        %761 = vadd.xlane.f32.xlu0 %v740
        %v762 = vpop.xlane.xlu0 %761
        %763 = vadd.xlane.f32.xlu0 %v741
        %v764 = vpop.xlane.xlu0 %763
        %765 = vadd.xlane.f32.xlu0 %v742
        %v766 = vpop.xlane.xlu0 %765
        %767 = vadd.xlane.f32.xlu0 %v743
        %v768 = vpop.xlane.xlu0 %767
        %769 = vadd.xlane.f32.xlu0 %v744
        %v770 = vpop.xlane.xlu0 %769
        %771 = vadd.xlane.f32.xlu0 %v745
        %v772 = vpop.xlane.xlu0 %771
        %773 = vadd.xlane.f32.xlu0 %v746
        %v774 = vpop.xlane.xlu0 %773
        %775 = vadd.xlane.f32.xlu0 %v747
        %v776 = vpop.xlane.xlu0 %775
        %777 = vadd.xlane.f32.xlu0 %v748
        %v778 = vpop.xlane.xlu0 %777
        %779 = vadd.xlane.f32.xlu0 %v749
        %v780 = vpop.xlane.xlu0 %779
        %781 = vadd.xlane.f32.xlu0 %v750
        %v782 = vpop.xlane.xlu0 %781
        %v783 = vmul.f32 %v735, %v735
        %v784 = vmul.f32 %v736, %v736
        %v785 = vmul.f32 %v737, %v737
        %v786 = vmul.f32 %v738, %v738
        %v787 = vmul.f32 %v739, %v739
        %v788 = vmul.f32 %v740, %v740
        %v789 = vmul.f32 %v741, %v741
        %v790 = vmul.f32 %v742, %v742
        %v791 = vmul.f32 %v743, %v743
        %v792 = vmul.f32 %v744, %v744
        %v793 = vmul.f32 %v745, %v745
        %v794 = vmul.f32 %v746, %v746
        %v795 = vmul.f32 %v747, %v747
        %v796 = vmul.f32 %v748, %v748
        %v797 = vmul.f32 %v749, %v749
        %v798 = vmul.f32 %v750, %v750
        %799 = vadd.xlane.f32.xlu0 %v783
        %v800 = vpop.xlane.xlu0 %799
        %801 = vadd.xlane.f32.xlu0 %v784
        %v802 = vpop.xlane.xlu0 %801
        %803 = vadd.xlane.f32.xlu0 %v785
        %v804 = vpop.xlane.xlu0 %803
        %805 = vadd.xlane.f32.xlu0 %v786
        %v806 = vpop.xlane.xlu0 %805
        %807 = vadd.xlane.f32.xlu0 %v787
        %v808 = vpop.xlane.xlu0 %807
        %809 = vadd.xlane.f32.xlu0 %v788
        %v810 = vpop.xlane.xlu0 %809
        %811 = vadd.xlane.f32.xlu0 %v789
        %v812 = vpop.xlane.xlu0 %811
        %813 = vadd.xlane.f32.xlu0 %v790
        %v814 = vpop.xlane.xlu0 %813
        %815 = vadd.xlane.f32.xlu0 %v791
        %v816 = vpop.xlane.xlu0 %815
        %817 = vadd.xlane.f32.xlu0 %v792
        %v818 = vpop.xlane.xlu0 %817
        %819 = vadd.xlane.f32.xlu0 %v793
        %v820 = vpop.xlane.xlu0 %819
        %821 = vadd.xlane.f32.xlu0 %v794
        %v822 = vpop.xlane.xlu0 %821
        %823 = vadd.xlane.f32.xlu0 %v795
        %v824 = vpop.xlane.xlu0 %823
        %825 = vadd.xlane.f32.xlu0 %v796
        %v826 = vpop.xlane.xlu0 %825
        %827 = vadd.xlane.f32.xlu0 %v797
        %v828 = vpop.xlane.xlu0 %827
        %829 = vadd.xlane.f32.xlu0 %v798
        %v830 = vpop.xlane.xlu0 %829
        %v831 = vmul.f32 %v752, 0.03125
        %v832 = vmul.f32 %v754, 0.03125
        %v833 = vmul.f32 %v756, 0.03125
        %v834 = vmul.f32 %v758, 0.03125
        %v835 = vmul.f32 %v760, 0.03125
        %v836 = vmul.f32 %v762, 0.03125
        %v837 = vmul.f32 %v764, 0.03125
        %v838 = vmul.f32 %v766, 0.03125
        %v839 = vmul.f32 %v768, 0.03125
        %v840 = vmul.f32 %v770, 0.03125
        %v841 = vmul.f32 %v772, 0.03125
        %v842 = vmul.f32 %v774, 0.03125
        %v843 = vmul.f32 %v776, 0.03125
        %v844 = vmul.f32 %v778, 0.03125
        %v845 = vmul.f32 %v780, 0.03125
        %v846 = vmul.f32 %v782, 0.03125
        %v847 = vmul.f32 %v800, 0.03125
        %v848 = vmul.f32 %v802, 0.03125
        %v849 = vmul.f32 %v804, 0.03125
        %v850 = vmul.f32 %v806, 0.03125
        %v851 = vmul.f32 %v808, 0.03125
        %v852 = vmul.f32 %v810, 0.03125
        %v853 = vmul.f32 %v812, 0.03125
        %v854 = vmul.f32 %v814, 0.03125
        %v855 = vmul.f32 %v816, 0.03125
        %v856 = vmul.f32 %v818, 0.03125
        %v857 = vmul.f32 %v820, 0.03125
        %v858 = vmul.f32 %v822, 0.03125
        %v859 = vmul.f32 %v824, 0.03125
        %v860 = vmul.f32 %v826, 0.03125
        %v861 = vmul.f32 %v828, 0.03125
        %v862 = vmul.f32 %v830, 0.03125
        %v863 = vmul.f32 %v831, %v831
        %v864 = vmul.f32 %v832, %v832
        %v865 = vmul.f32 %v833, %v833
        %v866 = vmul.f32 %v834, %v834
        %v867 = vmul.f32 %v835, %v835
        %v868 = vmul.f32 %v836, %v836
        %v869 = vmul.f32 %v837, %v837
        %v870 = vmul.f32 %v838, %v838
        %v871 = vmul.f32 %v839, %v839
        %v872 = vmul.f32 %v840, %v840
        %v873 = vmul.f32 %v841, %v841
        %v874 = vmul.f32 %v842, %v842
        %v875 = vmul.f32 %v843, %v843
        %v876 = vmul.f32 %v844, %v844
        %v877 = vmul.f32 %v845, %v845
        %v878 = vmul.f32 %v846, %v846
        %v879 = vsub.f32 %v847, %v863
        %v880 = vsub.f32 %v848, %v864
        %v881 = vsub.f32 %v849, %v865
        %v882 = vsub.f32 %v850, %v866
        %v883 = vsub.f32 %v851, %v867
        %v884 = vsub.f32 %v852, %v868
        %v885 = vsub.f32 %v853, %v869
        %v886 = vsub.f32 %v854, %v870
        %v887 = vsub.f32 %v855, %v871
        %v888 = vsub.f32 %v856, %v872
        %v889 = vsub.f32 %v857, %v873
        %v890 = vsub.f32 %v858, %v874
        %v891 = vsub.f32 %v859, %v875
        %v892 = vsub.f32 %v860, %v876
        %v893 = vsub.f32 %v861, %v877
        %v894 = vsub.f32 %v862, %v878
        %v895 = vmax.f32 %v879, 0.0
        %v896 = vmax.f32 %v880, 0.0
        %v897 = vmax.f32 %v881, 0.0
        %v898 = vmax.f32 %v882, 0.0
        %v899 = vmax.f32 %v883, 0.0
        %v900 = vmax.f32 %v884, 0.0
        %v901 = vmax.f32 %v885, 0.0
        %v902 = vmax.f32 %v886, 0.0
        %v903 = vmax.f32 %v887, 0.0
        %v904 = vmax.f32 %v888, 0.0
        %v905 = vmax.f32 %v889, 0.0
        %v906 = vmax.f32 %v890, 0.0
        %v907 = vmax.f32 %v891, 0.0
        %v908 = vmax.f32 %v892, 0.0
        %v909 = vmax.f32 %v893, 0.0
        %v910 = vmax.f32 %v894, 0.0
        %v911 = vadd.f32 %v895, 1e-05
        %v912 = vadd.f32 %v896, 1e-05
        %v913 = vadd.f32 %v897, 1e-05
        %v914 = vadd.f32 %v898, 1e-05
        %v915 = vadd.f32 %v899, 1e-05
        %v916 = vadd.f32 %v900, 1e-05
        %v917 = vadd.f32 %v901, 1e-05
        %v918 = vadd.f32 %v902, 1e-05
        %v919 = vadd.f32 %v903, 1e-05
        %v920 = vadd.f32 %v904, 1e-05
        %v921 = vadd.f32 %v905, 1e-05
        %v922 = vadd.f32 %v906, 1e-05
        %v923 = vadd.f32 %v907, 1e-05
        %v924 = vadd.f32 %v908, 1e-05
        %v925 = vadd.f32 %v909, 1e-05
        %v926 = vadd.f32 %v910, 1e-05
        %v927 = vrsqrt.pop %v911
        %v928 = vrsqrt.pop %v912
        %v929 = vrsqrt.pop %v913
        %v930 = vrsqrt.pop %v914
        %v931 = vrsqrt.pop %v915
        %v932 = vrsqrt.pop %v916
        %v933 = vrsqrt.pop %v917
        %v934 = vrsqrt.pop %v918
        %v935 = vrsqrt.pop %v919
        %v936 = vrsqrt.pop %v920
        %v937 = vrsqrt.pop %v921
        %v938 = vrsqrt.pop %v922
        %v939 = vrsqrt.pop %v923
        %v940 = vrsqrt.pop %v924
        %v941 = vrsqrt.pop %v925
        %v942 = vrsqrt.pop %v926
        %v943 = vsub.f32 %v735, %v831
        %v944 = vsub.f32 %v736, %v832
        %v945 = vsub.f32 %v737, %v833
        %v946 = vsub.f32 %v738, %v834
        %v947 = vsub.f32 %v739, %v835
        %v948 = vsub.f32 %v740, %v836
        %v949 = vsub.f32 %v741, %v837
        %v950 = vsub.f32 %v742, %v838
        %v951 = vsub.f32 %v743, %v839
        %v952 = vsub.f32 %v744, %v840
        %v953 = vsub.f32 %v745, %v841
        %v954 = vsub.f32 %v746, %v842
        %v955 = vsub.f32 %v747, %v843
        %v956 = vsub.f32 %v748, %v844
        %v957 = vsub.f32 %v749, %v845
        %v958 = vsub.f32 %v750, %v846
        %v959 = vmul.f32 %v943, %v927
        %v960 = vmul.f32 %v944, %v928
        %v961 = vmul.f32 %v945, %v929
        %v962 = vmul.f32 %v946, %v930
        %v963 = vmul.f32 %v947, %v931
        %v964 = vmul.f32 %v948, %v932
        %v965 = vmul.f32 %v949, %v933
        %v966 = vmul.f32 %v950, %v934
        %v967 = vmul.f32 %v951, %v935
        %v968 = vmul.f32 %v952, %v936
        %v969 = vmul.f32 %v953, %v937
        %v970 = vmul.f32 %v954, %v938
        %v971 = vmul.f32 %v955, %v939
        %v972 = vmul.f32 %v956, %v940
        %v973 = vmul.f32 %v957, %v941
        %v974 = vmul.f32 %v958, %v942
        %v975 = vld [vmem:[%s3] sm:$0x1]
        %v977 = vlaneseq
        %v978 = vshrl.u32 %v977, 7
        %v979 = vsub.s32 0, %v978
        %v980 = vrot.slane %v975, %v979
        %v982 = vmul.f32 %v959, %v980
        %v983 = vmul.f32 %v960, %v980
        %v984 = vmul.f32 %v961, %v980
        %v985 = vmul.f32 %v962, %v980
        %v986 = vmul.f32 %v963, %v980
        %v987 = vmul.f32 %v964, %v980
        %v988 = vmul.f32 %v965, %v980
        %v989 = vmul.f32 %v966, %v980
        %v990 = vmul.f32 %v967, %v980
        %v991 = vmul.f32 %v968, %v980
        %v992 = vmul.f32 %v969, %v980
        %v993 = vmul.f32 %v970, %v980
        %v994 = vmul.f32 %v971, %v980
        %v995 = vmul.f32 %v972, %v980
        %v996 = vmul.f32 %v973, %v980
        %v997 = vmul.f32 %v974, %v980
        %v998 = vld [vmem:[%s4] sm:$0x1]
        %v1000 = vlaneseq
        %v1001 = vshrl.u32 %v1000, 7
        %v1002 = vsub.s32 0, %v1001
        %v1003 = vrot.slane %v998, %v1002
        %v1005 = vadd.f32 %v982, %v1003
        %v1006 = vadd.f32 %v983, %v1003
        %v1007 = vadd.f32 %v984, %v1003
        %v1008 = vadd.f32 %v985, %v1003
        %v1009 = vadd.f32 %v986, %v1003
        %v1010 = vadd.f32 %v987, %v1003
        %v1011 = vadd.f32 %v988, %v1003
        %v1012 = vadd.f32 %v989, %v1003
        %v1013 = vadd.f32 %v990, %v1003
        %v1014 = vadd.f32 %v991, %v1003
        %v1015 = vadd.f32 %v992, %v1003
        %v1016 = vadd.f32 %v993, %v1003
        %v1017 = vadd.f32 %v994, %v1003
        %v1018 = vadd.f32 %v995, %v1003
        %v1019 = vadd.f32 %v996, %v1003
        %v1020 = vadd.f32 %v997, %v1003
        %1021 = vst [vmem:[%s257] sm:$0xff] %v1005
        %1022 = vst [vmem:[%s257 + $0x8] sm:$0xff] %v1006
        %1023 = vst [vmem:[%s257 + $0x10] sm:$0xff] %v1007
        %1024 = vst [vmem:[%s257 + $0x18] sm:$0xff] %v1008
        %1025 = vst [vmem:[%s257 + $0x20] sm:$0xff] %v1009
        %1026 = vst [vmem:[%s257 + $0x28] sm:$0xff] %v1010
        %1027 = vst [vmem:[%s257 + $0x30] sm:$0xff] %v1011
        %1028 = vst [vmem:[%s257 + $0x38] sm:$0xff] %v1012
        %1029 = vst [vmem:[%s257 + $0x40] sm:$0xff] %v1013
        %1030 = vst [vmem:[%s257 + $0x48] sm:$0xff] %v1014
        %1031 = vst [vmem:[%s257 + $0x50] sm:$0xff] %v1015
        %1032 = vst [vmem:[%s257 + $0x58] sm:$0xff] %v1016
        %1033 = vst [vmem:[%s257 + $0x60] sm:$0xff] %v1017
        %1034 = vst [vmem:[%s257 + $0x68] sm:$0xff] %v1018
        %1035 = vst [vmem:[%s257 + $0x70] sm:$0xff] %v1019
        %1036 = vst [vmem:[%s257 + $0x78] sm:$0xff] %v1020
        %s1037 = sand.u32 %s141, 1
        %s1038 = scalar_lea.sflag [#allocation4], %s1037
        %s1039 = sand.u32 %s141, 1
        %s1040 = smul.addr %s1039, 128
        %s1041 = scalar_lea.vmem [#allocation7], %s1040
        // Predicated region
        $region49: #{tpu_custom_call.1} parent=39 // pred_check
          %p1042 = pneg %p151
        $region50: #{tpu_custom_call.1} parent=39 // pred_check_branch
          %1044 = sbr.rel (%p1042) target = $region52
        $region51: #{tpu_custom_call.1} parent=39 // pred_region
          %s1045 = smul.u32 16, %s23
          %s1047 = ssub.s32 2048, 2048
          %1048 = vsyncadd %s1038, %s1047
          %s1049 = smul.addr %s1045, 128
          %s1050 = scalar_lea.hbm %s5, %s1049
          %s1051 = sshll.u32 %s1041, 4
          %s1052 = int_to_ptr.vmem [resolvable:$true] %s1051
          %1057 = dma.vmem_to_hbm [thread:$0]  %s1052, 2048, %s1050, %s1038, 128, 128, 8
        $region52: #{tpu_custom_call.1} parent=39 // pred_fallthru
          _
      $region40: #{tpu_custom_call.1} parent=5 // pred_fallthru
        _
      %p1058 = scmp.le.s32.totalorder 2, %s18
      // Predicated region
      $region53: #{tpu_custom_call.1} parent=5 // pred_check
        %p1059 = pneg %p1058
      $region54: #{tpu_custom_call.1} parent=5 // pred_check_branch
        %1061 = sbr.rel (%p1059) target = $region56
      $region55: #{tpu_custom_call.1} parent=5 // pred_region
        %s1062 = ssub.s32 %s18, 2
        // Predicated region
        $region57: #{tpu_custom_call.1} parent=55 // pred_check
          %p1063 = pneg %p157
        $region58: #{tpu_custom_call.1} parent=55 // pred_check_branch
          %1065 = sbr.rel (%p1063) target = $region60
        $region59: #{tpu_custom_call.1} parent=55 // pred_region
          %s1066 = sand.u32 %s142, 1
          %s1067 = scalar_lea.sflag [#allocation4], %s1066
          %s1068 = sand.u32 %s142, 1
          %s1069 = smul.addr %s1068, 128
          %s1070 = scalar_lea.vmem [#allocation7], %s1069
          %1071 = dma.done %s1067, 2048
        $region60: #{tpu_custom_call.1} parent=55 // pred_fallthru
          _
      $region56: #{tpu_custom_call.1} parent=5 // pred_fallthru
        _
    $region6: #{tpu_custom_call.1} parent=1 // loop_footer
      %s22 = sadd.s32 1, %s18
    $region7: #{tpu_custom_call.1} parent=1 // loop_footer_branch
      %17 = sbr.rel target = $region3
    $region8: #{tpu_custom_call.1} parent=1 // loop_exit
      _
    %1072 = vsyncpa [#allocation3], 1
    %s1073 = scalar_lea.sflag [#allocation3], 1
    %1074 = vsyncpa %s1073, 1
    %1075 = vsyncpa [#allocation6], 1
    %1076 = vsyncpa [#allocation4], 1
    %s1077 = scalar_lea.sflag [#allocation4], 1
    %1078 = vsyncpa %s1077, 1

</llo_original>
